<compile_context>
chip_gen: v7x
topology: tpu7x:2x2x1
jax: 0.10.0
libtpu: 0.0.40
codegen_flags: <defaults>
</compile_context>

<pallas_src>
import functools
import numpy as np

import jax
import jax.numpy as jnp
from jax import lax
from jax.experimental import pallas as pl
from jax.experimental.pallas import tpu as pltpu


def _round_up(x, m):
    return ((x + m - 1) // m) * m


def _chi_rbf_kernel(*refs, num_chi, num_chi_bins, bin_scale, has_mask):
    # refs (has_mask=True):  chi (TM,C), mask (TM,C), W (F,dim_out), b (1,dim_out), out (TM,dim_out)
    # refs (has_mask=False): chi (TM,C),              W (F,dim_out), b (1,dim_out), out (TM,dim_out)
    if has_mask:
        chi_ref, mask_ref, w_ref, b_ref, out_ref = refs
    else:
        chi_ref, w_ref, b_ref, out_ref = refs
        mask_ref = None

    chi = chi_ref[...]                       # (TM, C) f32
    tm = chi.shape[0]
    C = num_chi
    K = num_chi_bins

    # Bin centers as compile-time constants: k * 2*pi/K, shape (1, K).
    centers = (lax.broadcasted_iota(jnp.int32, (1, K), 1).astype(jnp.float32)
               * jnp.float32(2.0 * np.pi / K))

    delta_adjacent = 1.0 - np.cos(2.0 * np.pi / K)          # static scalar
    scale = jnp.float32(bin_scale / delta_adjacent)

    # Lane-dense feature build:
    #   per-chi broadcast subtract (cheap VPU), one lane concat to (TM, C*K),
    #   then a single cos + exp over the full 64-lane block (EUP).
    diff = jnp.concatenate(
        [chi[:, c:c + 1] - centers for c in range(C)], axis=-1)   # (TM, C*K)
    feats = jnp.exp((jnp.cos(diff) - 1.0) * scale)                # (TM, C*K)

    if has_mask:
        mask = mask_ref[...]                                      # (TM, C)
        mask_exp = jnp.concatenate(
            [jnp.broadcast_to(mask[:, c:c + 1], (tm, K)) for c in range(C)],
            axis=-1)                                              # (TM, C*K)
        feats = feats * mask_exp

    out_ref[...] = (
        jnp.dot(feats, w_ref[...], preferred_element_type=jnp.float32)
        + b_ref[...]
    )


def node_chi_rbf_forward(chi, weight, bias, *, num_chi, num_chi_bins,
                         bin_scale=2.0, mask_chi=None, tile_rows=None):
    """chi: (B, N, num_chi) f32 -> (B, N, dim_out) f32."""
    B, N, C = chi.shape
    assert C == num_chi
    F = num_chi * num_chi_bins
    dim_out = weight.shape[1]
    assert weight.shape == (F, dim_out)

    rows = B * N
    chi2d = chi.reshape(rows, C).astype(jnp.float32)
    has_mask = mask_chi is not None
    if has_mask:
        mask2d = mask_chi.reshape(rows, C).astype(jnp.float32)

    # Large row tiles amortize the ~0.35us/step pipeline overhead. Keep a
    # multiple of 8 (sublane) and aim for >=2 grid steps so v7x's two
    # TensorCores both get work via the "parallel" dimension semantics.
    if tile_rows is None:
        tile_rows = min(1024, _round_up(pl.cdiv(rows, 2), 8))
    tile_rows = max(8, _round_up(int(tile_rows), 8))

    pad_rows = (-rows) % tile_rows
    if pad_rows:
        chi2d = jnp.pad(chi2d, ((0, pad_rows), (0, 0)))
        if has_mask:
            mask2d = jnp.pad(mask2d, ((0, pad_rows), (0, 0)))
    total_rows = rows + pad_rows

    bias2d = bias.reshape(1, dim_out).astype(jnp.float32)
    weight = weight.astype(jnp.float32)

    kernel = functools.partial(
        _chi_rbf_kernel,
        num_chi=num_chi,
        num_chi_bins=num_chi_bins,
        bin_scale=float(bin_scale),
        has_mask=has_mask,
    )

    row_spec = pl.BlockSpec((tile_rows, C), lambda i: (i, 0))
    in_specs = [row_spec]
    inputs = [chi2d]
    if has_mask:
        in_specs.append(row_spec)
        inputs.append(mask2d)
    in_specs += [
        pl.BlockSpec((F, dim_out), lambda i: (0, 0)),   # W (same block every step)
        pl.BlockSpec((1, dim_out), lambda i: (0, 0)),   # bias
    ]
    inputs += [weight, bias2d]

    cost = pl.CostEstimate(
        flops=2 * rows * F * dim_out,
        transcendentals=2 * rows * F,                    # cos + exp per feature
        bytes_accessed=4 * (rows * C * (2 if has_mask else 1)
                            + rows * dim_out + F * dim_out + dim_out),
    )

    grid = (total_rows // tile_rows,)
    out2d = pl.pallas_call(
        kernel,
        out_shape=jax.ShapeDtypeStruct((total_rows, dim_out), jnp.float32),
        grid_spec=pltpu.PrefetchScalarGridSpec(
            num_scalar_prefetch=0,
            grid=grid,
            in_specs=in_specs,
            out_specs=pl.BlockSpec((tile_rows, dim_out), lambda i: (i, 0)),
        ),
        compiler_params=pltpu.CompilerParams(
            dimension_semantics=("parallel",)),
        cost_estimate=cost,
    )(*inputs)

    return out2d[:rows].reshape(B, N, dim_out)


def node_chi_rbf_reference(chi, weight, bias, *, num_chi, num_chi_bins,
                           bin_scale=2.0, mask_chi=None):
    """Pure-JAX reference mirroring the PyTorch module."""
    B, N, _ = chi.shape
    centers = (jnp.arange(num_chi_bins, dtype=jnp.float32)
               * (2.0 * np.pi / num_chi_bins)).reshape(1, 1, 1, -1)
    delta_adjacent = 1.0 - np.cos(2.0 * np.pi / num_chi_bins)
    cosine = jnp.cos(chi[..., None] - centers)
    feats = jnp.exp((cosine - 1.0) * bin_scale / delta_adjacent)
    if mask_chi is not None:
        feats = mask_chi[..., None] * feats
    feats = feats.reshape(B, N, num_chi * num_chi_bins)
    return feats @ weight + bias


if __name__ == "__main__":
    # Module config (small, consistent with the PyTorch module).
    dim_out = 32
    num_chi = 4
    num_chi_bins = 16
    bin_scale = 2.0
    B, N = 2, 8

    key = jax.random.PRNGKey(0)
    k_chi, k_mask, k_w, k_b = jax.random.split(key, 4)

    chi = jax.random.uniform(k_chi, (B, N, num_chi), jnp.float32,
                             minval=-np.pi, maxval=np.pi)
    mask_chi = (jax.random.uniform(k_mask, (B, N, num_chi)) > 0.2).astype(jnp.float32)

    # Deterministic nn.Linear-style init for embed: (F, dim_out) weight, (dim_out,) bias.
    F = num_chi * num_chi_bins
    bound = 1.0 / np.sqrt(F)
    weight = jax.random.uniform(k_w, (F, dim_out), jnp.float32, -bound, bound)
    bias = jax.random.uniform(k_b, (dim_out,), jnp.float32, -bound, bound)

    # Masked variant.
    out = node_chi_rbf_forward(chi, weight, bias,
                               num_chi=num_chi, num_chi_bins=num_chi_bins,
                               bin_scale=bin_scale, mask_chi=mask_chi)
    out = jax.block_until_ready(out)
    ref = node_chi_rbf_reference(chi, weight, bias,
                                 num_chi=num_chi, num_chi_bins=num_chi_bins,
                                 bin_scale=bin_scale, mask_chi=mask_chi)
    assert out.shape == (B, N, dim_out)
    np.testing.assert_allclose(np.asarray(out), np.asarray(ref),
                               rtol=1e-5, atol=1e-5)

    # Unmasked variant (exercises the specialized no-mask kernel: no mask DMA).
    out_nm = node_chi_rbf_forward(chi, weight, bias,
                                  num_chi=num_chi, num_chi_bins=num_chi_bins,
                                  bin_scale=bin_scale, mask_chi=None)
    out_nm = jax.block_until_ready(out_nm)
    ref_nm = node_chi_rbf_reference(chi, weight, bias,
                                    num_chi=num_chi, num_chi_bins=num_chi_bins,
                                    bin_scale=bin_scale, mask_chi=None)
    np.testing.assert_allclose(np.asarray(out_nm), np.asarray(ref_nm),
                               rtol=1e-5, atol=1e-5)

    print("KERNEL_OK")
</pallas_src>

<mosaic_0001>
module attributes {stable_mosaic.version = 11 : i64} {
  func.func @_chi_rbf_kernel(%arg0: i32, %arg1: memref<8x4xf32, #tpu.memory_space<vmem>>, %arg2: memref<8x4xf32, #tpu.memory_space<vmem>>, %arg3: memref<64x32xf32, #tpu.memory_space<vmem>>, %arg4: memref<1x32xf32, #tpu.memory_space<vmem>>, %arg5: memref<8x32xf32, #tpu.memory_space<vmem>>) attributes {dimension_semantics = [#tpu.dimension_semantics<parallel>], iteration_bounds = array<i64: 2>, scalar_prefetch = 0 : i64, scratch_operands = 0 : i64, tpu.core_type = #tpu.core_type<tc>, window_params = [{transform_indices = @transform_0, window_bounds = array<i64: 8, 4>}, {transform_indices = @transform_1, window_bounds = array<i64: 8, 4>}, {pipeline_mode = #tpu.pipeline_mode<synchronous>, transform_indices = @transform_2, window_bounds = array<i64: 64, 32>}, {pipeline_mode = #tpu.pipeline_mode<synchronous>, transform_indices = @transform_3, window_bounds = array<i64: 1, 32>}, {transform_indices = @transform_4, window_bounds = array<i64: 8, 32>}]} {
    %c0 = arith.constant 0 : index
    %c0_0 = arith.constant 0 : index
    %0 = vector.load %arg1[%c0, %c0_0] : memref<8x4xf32, #tpu.memory_space<vmem>>, vector<8x4xf32>
    %1 = tpu.iota {dimensions = array<i32: 1>} : vector<1x16xi32>
    %2 = arith.sitofp %1 : vector<1x16xi32> to vector<1x16xf32>
    %cst = arith.constant 0.392699093 : f32
    %3 = vector.broadcast %cst : f32 to vector<1x16xf32>
    %4 = arith.mulf %2, %3 : vector<1x16xf32>
    %5 = vector.extract_strided_slice %0 {offsets = [0, 0], sizes = [8, 1], strides = [1, 1]} : vector<8x4xf32> to vector<8x1xf32>
    %6 = vector.broadcast %5 : vector<8x1xf32> to vector<8x16xf32>
    %7 = vector.broadcast %4 : vector<1x16xf32> to vector<8x16xf32>
    %8 = arith.subf %6, %7 : vector<8x16xf32>
    %9 = vector.extract_strided_slice %0 {offsets = [0, 1], sizes = [8, 1], strides = [1, 1]} : vector<8x4xf32> to vector<8x1xf32>
    %10 = vector.broadcast %9 : vector<8x1xf32> to vector<8x16xf32>
    %11 = vector.broadcast %4 : vector<1x16xf32> to vector<8x16xf32>
    %12 = arith.subf %10, %11 : vector<8x16xf32>
    %13 = vector.extract_strided_slice %0 {offsets = [0, 2], sizes = [8, 1], strides = [1, 1]} : vector<8x4xf32> to vector<8x1xf32>
    %14 = vector.broadcast %13 : vector<8x1xf32> to vector<8x16xf32>
    %15 = vector.broadcast %4 : vector<1x16xf32> to vector<8x16xf32>
    %16 = arith.subf %14, %15 : vector<8x16xf32>
    %17 = vector.extract_strided_slice %0 {offsets = [0, 3], sizes = [8, 1], strides = [1, 1]} : vector<8x4xf32> to vector<8x1xf32>
    %18 = vector.broadcast %17 : vector<8x1xf32> to vector<8x16xf32>
    %19 = vector.broadcast %4 : vector<1x16xf32> to vector<8x16xf32>
    %20 = arith.subf %18, %19 : vector<8x16xf32>
    %21 = tpu.concatenate %8, %12, %16, %20 in 1 : vector<8x16xf32>, vector<8x16xf32>, vector<8x16xf32>, vector<8x16xf32> -> vector<8x64xf32>
    %22 = math.cos %21 : vector<8x64xf32>
    %cst_1 = arith.constant 1.000000e+00 : f32
    %23 = vector.broadcast %cst_1 : f32 to vector<8x64xf32>
    %24 = arith.subf %22, %23 : vector<8x64xf32>
    %cst_2 = arith.constant 26.2741432 : f32
    %25 = vector.broadcast %cst_2 : f32 to vector<8x64xf32>
    %26 = arith.mulf %24, %25 : vector<8x64xf32>
    %27 = math.exp %26 : vector<8x64xf32>
    %c0_3 = arith.constant 0 : index
    %c0_4 = arith.constant 0 : index
    %28 = vector.load %arg2[%c0_3, %c0_4] : memref<8x4xf32, #tpu.memory_space<vmem>>, vector<8x4xf32>
    %29 = vector.extract_strided_slice %28 {offsets = [0, 0], sizes = [8, 1], strides = [1, 1]} : vector<8x4xf32> to vector<8x1xf32>
    %30 = vector.shape_cast %29 : vector<8x1xf32> to vector<8x1xf32>
    %31 = vector.broadcast %30 : vector<8x1xf32> to vector<8x16xf32>
    %32 = vector.extract_strided_slice %28 {offsets = [0, 1], sizes = [8, 1], strides = [1, 1]} : vector<8x4xf32> to vector<8x1xf32>
    %33 = vector.shape_cast %32 : vector<8x1xf32> to vector<8x1xf32>
    %34 = vector.broadcast %33 : vector<8x1xf32> to vector<8x16xf32>
    %35 = vector.extract_strided_slice %28 {offsets = [0, 2], sizes = [8, 1], strides = [1, 1]} : vector<8x4xf32> to vector<8x1xf32>
    %36 = vector.shape_cast %35 : vector<8x1xf32> to vector<8x1xf32>
    %37 = vector.broadcast %36 : vector<8x1xf32> to vector<8x16xf32>
    %38 = vector.extract_strided_slice %28 {offsets = [0, 3], sizes = [8, 1], strides = [1, 1]} : vector<8x4xf32> to vector<8x1xf32>
    %39 = vector.shape_cast %38 : vector<8x1xf32> to vector<8x1xf32>
    %40 = vector.broadcast %39 : vector<8x1xf32> to vector<8x16xf32>
    %41 = tpu.concatenate %31, %34, %37, %40 in 1 : vector<8x16xf32>, vector<8x16xf32>, vector<8x16xf32>, vector<8x16xf32> -> vector<8x64xf32>
    %42 = arith.mulf %27, %41 : vector<8x64xf32>
    %c0_5 = arith.constant 0 : index
    %c0_6 = arith.constant 0 : index
    %43 = vector.load %arg3[%c0_5, %c0_6] : memref<64x32xf32, #tpu.memory_space<vmem>>, vector<64x32xf32>
    %cst_7 = arith.constant dense<0.000000e+00> : vector<8x32xf32>
    %44 = tpu.matmul %42, %43, %cst_7 {dimension_numbers = #tpu.dot_dimension_numbers<[1], [0], [0], [1], [0, 0, 1, 1], [], []>} : vector<8x64xf32>, vector<64x32xf32>, vector<8x32xf32> -> vector<8x32xf32>
    %c0_8 = arith.constant 0 : index
    %c0_9 = arith.constant 0 : index
    %45 = vector.load %arg4[%c0_8, %c0_9] : memref<1x32xf32, #tpu.memory_space<vmem>>, vector<1x32xf32>
    %46 = vector.broadcast %45 : vector<1x32xf32> to vector<8x32xf32>
    %47 = arith.addf %44, %46 : vector<8x32xf32>
    %c0_10 = arith.constant 0 : index
    %c0_11 = arith.constant 0 : index
    %48 = vector.load %arg5[%c0_10, %c0_11] : memref<8x32xf32, #tpu.memory_space<vmem>>, vector<8x32xf32>
    tpu.vector_store %arg5[%c0_10, %c0_11], %47 {strides = array<i32>} : memref<8x32xf32, #tpu.memory_space<vmem>>, vector<8x32xf32>,
    return
  }
  func.func @transform_0(%arg0: i32) -> (i32, i32) {
    %c0_i32 = arith.constant 0 : i32
    %c0_i32_0 = arith.constant 0 : i32
    return %arg0, %c0_i32 : i32, i32
  }
  func.func @transform_1(%arg0: i32) -> (i32, i32) {
    %c0_i32 = arith.constant 0 : i32
    %c0_i32_0 = arith.constant 0 : i32
    return %arg0, %c0_i32 : i32, i32
  }
  func.func @transform_2(%arg0: i32) -> (i32, i32) {
    %c0_i32 = arith.constant 0 : i32
    %c0_i32_0 = arith.constant 0 : i32
    %c0_i32_1 = arith.constant 0 : i32
    return %c0_i32, %c0_i32_0 : i32, i32
  }
  func.func @transform_3(%arg0: i32) -> (i32, i32) {
    %c0_i32 = arith.constant 0 : i32
    %c0_i32_0 = arith.constant 0 : i32
    %c0_i32_1 = arith.constant 0 : i32
    return %c0_i32, %c0_i32_0 : i32, i32
  }
  func.func @transform_4(%arg0: i32) -> (i32, i32) {
    %c0_i32 = arith.constant 0 : i32
    %c0_i32_0 = arith.constant 0 : i32
    return %arg0, %c0_i32 : i32, i32
  }
}

</mosaic_0001>

<llo_original>
// kernel: tpu_custom_call.1
$region0: #{tpu_custom_call.1}
  #allocation0 [shape = 'u32[]', space=smem, size = 0x4, offset = 0x4, fixed_abs, tag = 'smem constant byte address 0x4 - core index']
  #allocation1 [shape = 'u32[144,128]{1,0:T(1,128)}', space=vmem, size = 0x12000, scoped, tag = 'internal scratch']
  %s0 = inlined_call_operand.vmem [shape: f32[16,4], index: 0, kind: input, shape index: {}]
  %s1 = inlined_call_operand.vmem [shape: f32[16,4], index: 1, kind: input, shape index: {}]
  %s2 = inlined_call_operand.vmem [shape: f32[64,32], index: 2, kind: input, shape index: {}]
  %s3 = inlined_call_operand.vmem [shape: f32[1,32], index: 3, kind: input, shape index: {}]
  %s4 = inlined_call_operand.hbm [shape: f32[16,32], index: 4, kind: output, shape index: {}]
  %s5 = sld [smem:[#allocation0]]
  $region49: #{tpu_custom_call.1} parent=0
    _
  %s7 = ssub.s32 1, %s5
  %s8 = scalar_select 0, %s7, %s5
  $region1: #{tpu_custom_call.1} parent=0
    #allocation2 [shape = 'u8[8192]{0}', space=vmem, size = 0x2000, scoped, tag = 'output window, operand 0']
    #allocation3 [shape = 's32[2]{0}', space=sflag, size = 0x8, scoped, tag = 'scoped memory for tpu_custom_call.1']
    %9 = vsyncpa [#allocation3], 0
    %s10 = scalar_lea.sflag [#allocation3], 1
    %11 = vsyncpa %s10, 0
    loop: start=0, step=1, limit=4
    $region2: #{tpu_custom_call.1} parent=1 // loop_pre_header
      _
    $region3: #{tpu_custom_call.1} parent=1 // loop_header
      %s13 = sphi 0, %s17
      %p14 = scmp.ge.s32.totalorder %s13, 4
      %s23 = sphi 0, %s25
      %s26 = sphi 0, %s23
      %s27 = sphi 0, %s26
      %s43 = sphi 0, %s27
      %s49 = sphi 0, %s51
      %s52 = sphi 0, %s49
      %s53 = sphi 0, %s52
      %s69 = sphi 0, %s53
      %s73 = sphi 0, %s73
      %s75 = sphi 0, %s73
      %s76 = sphi 0, %s75
      %s90 = sphi 0, %s76
      %s94 = sphi 0, %s94
      %s96 = sphi 0, %s94
      %s97 = sphi 0, %s96
      %s111 = sphi 0, %s97
      %s117 = sphi 0, %s119
      %s120 = sphi 0, %s117
      %s121 = sphi 0, %s120
      %s137 = sphi 0, %s121
    $region4: #{tpu_custom_call.1} parent=1 // loop_header_branch
      %16 = sbr.rel (%p14) target = $region8
    $region5: #{tpu_custom_call.1} parent=1 // loop_body
      %s18 = ssub.s32 %s13, 1
      %s19 = ssub.s32 %s13, 2
      %s20 = sadd.s32 %s13, 1
      %s21 = ssub.s32 %s13, %s20
      %p22 = scmp.eq.s32.totalorder %s21, 0
      %s24 = sadd.s32 %s23, 1
      %s25 = scalar_select %p22, %s23, %s24
      %p28 = pneg %p22
      %p29 = scmp.eq.s32.totalorder %s13, 1
      %p30 = por %p28, %p29
      %p31 = scmp.ne.s32.totalorder %s23, %s26
      %p32 = scmp.eq.s32.totalorder %s13, 0
      %p33 = por %p31, %p32
      %p34 = scmp.ne.s32.totalorder %s23, %s26
      %p35 = scmp.eq.s32.totalorder %s18, 1
      %p36 = por %p34, %p35
      %p37 = scmp.ne.s32.totalorder %s26, %s27
      %p38 = scmp.eq.s32.totalorder %s18, 0
      %p39 = por %p37, %p38
      %p40 = scmp.ne.s32.totalorder %s26, %s27
      %p41 = scmp.eq.s32.totalorder %s19, 1
      %p42 = por %p40, %p41
      %p44 = scmp.ne.s32.totalorder %s27, %s43
      %p45 = scmp.eq.s32.totalorder %s19, 0
      %p46 = por %p44, %p45
      %s47 = ssub.s32 %s13, %s20
      %p48 = scmp.eq.s32.totalorder %s47, 0
      %s50 = sadd.s32 %s49, 1
      %s51 = scalar_select %p48, %s49, %s50
      %p54 = pneg %p48
      %p55 = scmp.eq.s32.totalorder %s13, 1
      %p56 = por %p54, %p55
      %p57 = scmp.ne.s32.totalorder %s49, %s52
      %p58 = scmp.eq.s32.totalorder %s13, 0
      %p59 = por %p57, %p58
      %p60 = scmp.ne.s32.totalorder %s49, %s52
      %p61 = scmp.eq.s32.totalorder %s18, 1
      %p62 = por %p60, %p61
      %p63 = scmp.ne.s32.totalorder %s52, %s53
      %p64 = scmp.eq.s32.totalorder %s18, 0
      %p65 = por %p63, %p64
      %p66 = scmp.ne.s32.totalorder %s52, %s53
      %p67 = scmp.eq.s32.totalorder %s19, 1
      %p68 = por %p66, %p67
      %p70 = scmp.ne.s32.totalorder %s53, %s69
      %p71 = scmp.eq.s32.totalorder %s19, 0
      %p72 = por %p70, %p71
      %s74 = sadd.s32 %s73, 1
      %p77 = scmp.eq.s32.totalorder %s13, 1
      %p78 = scmp.ne.s32.totalorder %s73, %s75
      %p79 = scmp.eq.s32.totalorder %s13, 0
      %p80 = por %p78, %p79
      %p81 = scmp.ne.s32.totalorder %s73, %s75
      %p82 = scmp.eq.s32.totalorder %s18, 1
      %p83 = por %p81, %p82
      %p84 = scmp.ne.s32.totalorder %s75, %s76
      %p85 = scmp.eq.s32.totalorder %s18, 0
      %p86 = por %p84, %p85
      %p87 = scmp.ne.s32.totalorder %s75, %s76
      %p88 = scmp.eq.s32.totalorder %s19, 1
      %p89 = por %p87, %p88
      %p91 = scmp.ne.s32.totalorder %s76, %s90
      %p92 = scmp.eq.s32.totalorder %s19, 0
      %p93 = por %p91, %p92
      %s95 = sadd.s32 %s94, 1
      %p98 = scmp.eq.s32.totalorder %s13, 1
      %p99 = scmp.ne.s32.totalorder %s94, %s96
      %p100 = scmp.eq.s32.totalorder %s13, 0
      %p101 = por %p99, %p100
      %p102 = scmp.ne.s32.totalorder %s94, %s96
      %p103 = scmp.eq.s32.totalorder %s18, 1
      %p104 = por %p102, %p103
      %p105 = scmp.ne.s32.totalorder %s96, %s97
      %p106 = scmp.eq.s32.totalorder %s18, 0
      %p107 = por %p105, %p106
      %p108 = scmp.ne.s32.totalorder %s96, %s97
      %p109 = scmp.eq.s32.totalorder %s19, 1
      %p110 = por %p108, %p109
      %p112 = scmp.ne.s32.totalorder %s97, %s111
      %p113 = scmp.eq.s32.totalorder %s19, 0
      %p114 = por %p112, %p113
      %s115 = ssub.s32 %s13, %s20
      %p116 = scmp.eq.s32.totalorder %s115, 0
      %s118 = sadd.s32 %s117, 1
      %s119 = scalar_select %p116, %s117, %s118
      %p122 = pneg %p116
      %p123 = scmp.eq.s32.totalorder %s13, 1
      %p124 = por %p122, %p123
      %p125 = scmp.ne.s32.totalorder %s117, %s120
      %p126 = scmp.eq.s32.totalorder %s13, 0
      %p127 = por %p125, %p126
      %p128 = scmp.ne.s32.totalorder %s117, %s120
      %p129 = scmp.eq.s32.totalorder %s18, 1
      %p130 = por %p128, %p129
      %p131 = scmp.ne.s32.totalorder %s120, %s121
      %p132 = scmp.eq.s32.totalorder %s18, 0
      %p133 = por %p131, %p132
      %p134 = scmp.ne.s32.totalorder %s120, %s121
      %p135 = scmp.eq.s32.totalorder %s19, 1
      %p136 = por %p134, %p135
      %p138 = scmp.ne.s32.totalorder %s121, %s137
      %p139 = scmp.eq.s32.totalorder %s19, 0
      %p140 = por %p138, %p139
      %p141 = scmp.le.s32.totalorder 1, %s13
      %p142 = scmp.lt.s32.totalorder %s13, 3
      %p143 = pnand %p141, %p142
      %p144 = pneg %p143
      // Predicated region
      $region9: #{tpu_custom_call.1} parent=5 // pred_check
        _
      $region10: #{tpu_custom_call.1} parent=5 // pred_check_branch
        %146 = sbr.rel (%p143) target = $region12
      $region11: #{tpu_custom_call.1} parent=5 // pred_region
        %s147 = ssub.s32 %s13, 1
        // Predicated region
        $region13: #{tpu_custom_call.1} parent=11 // pred_check
          %p148 = pneg %p86
        $region14: #{tpu_custom_call.1} parent=11 // pred_check_branch
          %150 = sbr.rel (%p148) target = $region16
        $region15: #{tpu_custom_call.1} parent=11 // pred_region
          _
        $region16: #{tpu_custom_call.1} parent=11 // pred_fallthru
          _
        // Predicated region
        $region17: #{tpu_custom_call.1} parent=11 // pred_check
          %p151 = pneg %p107
        $region18: #{tpu_custom_call.1} parent=11 // pred_check_branch
          %153 = sbr.rel (%p151) target = $region20
        $region19: #{tpu_custom_call.1} parent=11 // pred_region
          _
        $region20: #{tpu_custom_call.1} parent=11 // pred_fallthru
          _
      $region12: #{tpu_custom_call.1} parent=5 // pred_fallthru
        _
      %p154 = scmp.lt.s32.totalorder %s13, 2
      // Predicated region
      $region21: #{tpu_custom_call.1} parent=5 // pred_check
        %p155 = pneg %p154
      $region22: #{tpu_custom_call.1} parent=5 // pred_check_branch
        %157 = sbr.rel (%p155) target = $region24
      $region23: #{tpu_custom_call.1} parent=5 // pred_region
        // Predicated region
        $region25: #{tpu_custom_call.1} parent=23 // pred_check
          %p158 = pneg %p33
        $region26: #{tpu_custom_call.1} parent=23 // pred_check_branch
          %160 = sbr.rel (%p158) target = $region28
        $region27: #{tpu_custom_call.1} parent=23 // pred_region
          %p161 = scmp.lt.s32.totalorder %s13, 1
          %s162 = scalar_select %p161, %s13, 1
          %s163 = smul.addr %s162, 8
          %s164 = scalar_lea.vmem %s0, %s163
        $region28: #{tpu_custom_call.1} parent=23 // pred_fallthru
          _
        // Predicated region
        $region29: #{tpu_custom_call.1} parent=23 // pred_check
          %p165 = pneg %p59
        $region30: #{tpu_custom_call.1} parent=23 // pred_check_branch
          %167 = sbr.rel (%p165) target = $region32
        $region31: #{tpu_custom_call.1} parent=23 // pred_region
          %p168 = scmp.lt.s32.totalorder %s13, 1
          %s169 = scalar_select %p168, %s13, 1
          %s170 = smul.addr %s169, 8
          %s171 = scalar_lea.vmem %s1, %s170
        $region32: #{tpu_custom_call.1} parent=23 // pred_fallthru
          _
      $region24: #{tpu_custom_call.1} parent=5 // pred_fallthru
        _
      %p172 = scmp.le.s32.totalorder 1, %s13
      %p173 = scmp.lt.s32.totalorder %s13, 3
      %p174 = pnand %p172, %p173
      %p175 = pneg %p174
      // Predicated region
      $region33: #{tpu_custom_call.1} parent=5 // pred_check
        _
      $region34: #{tpu_custom_call.1} parent=5 // pred_check_branch
        %177 = sbr.rel (%p174) target = $region36
      $region35: #{tpu_custom_call.1} parent=5 // pred_region
        %s178 = ssub.s32 %s13, 1
        %p179 = scmp.lt.s32.totalorder %s18, 1
        %s180 = scalar_select %p179, %s18, 1
        %s181 = smul.addr %s180, 8
        %s182 = scalar_lea.vmem %s0, %s181
        %p183 = pneg %p39
        %p184 = pneg %p36
        %p185 = scmp.lt.s32.totalorder %s18, 1
        %s186 = scalar_select %p185, %s18, 1
        %s187 = smul.addr %s186, 8
        %s188 = scalar_lea.vmem %s1, %s187
        %p189 = pneg %p65
        %p190 = pneg %p62
        %p191 = pneg %p86
        %p192 = pneg %p83
        %p193 = pneg %p107
        %p194 = pneg %p104
        %p195 = pneg %p133
        %p196 = pneg %p130
        %s197 = sand.u32 %s120, 1
        %s198 = scalar_lea.sflag [#allocation3], %s197
        %s199 = sand.u32 %s120, 1
        %s200 = smul.addr %s199, 8
        %s201 = scalar_lea.vmem [#allocation2], %s200
        %p202 = scmp.lt.s32.totalorder %s18, 1
        %s203 = scalar_select %p202, %s18, 1
        %s204 = smul.addr %s203, 8
        %s205 = scalar_lea.vmem %s0, %s204
        %p206 = scmp.lt.s32.totalorder %s18, 1
        %s207 = scalar_select %p206, %s18, 1
        %s208 = smul.addr %s207, 8
        %s209 = scalar_lea.vmem %s1, %s208
        %v210 = vld [vmem:[%s205] sm:$0xff]
        %v211 = vlaneseq
        %v212 = vand.u32 %v211, 127
        %v213 = vcvt.s32.f32 %v212
        %v214 = vmul.f32 %v213, 0.3926991
        %216 = vset.pattern.permute.xlu0 0
        %217 = vperm.xlu0 %216, %v210
        %v218 = vpop.permute.xlu0 %217
        %v220 = vsub.f32 %v218, %v214
        %221 = vset.pattern.permute.xlu0 1
        %222 = vperm.xlu0 %221, %v210
        %v223 = vpop.permute.xlu0 %222
        %v225 = vsub.f32 %v223, %v214
        %226 = vset.pattern.permute.xlu0 2
        %227 = vperm.xlu0 %226, %v210
        %v228 = vpop.permute.xlu0 %227
        %v230 = vsub.f32 %v228, %v214
        %231 = vset.pattern.permute.xlu0 3
        %232 = vperm.xlu0 %231, %v210
        %v233 = vpop.permute.xlu0 %232
        %v235 = vsub.f32 %v233, %v214
        %237 = vrot.lane.b32.xlu0 %v225, 16
        %v238 = vpop.permute.xlu0 %237
        %241 = vrot.lane.b32.xlu0 %v230, 32
        %v242 = vpop.permute.xlu0 %241
        %245 = vrot.lane.b32.xlu0 %v235, 48
        %v246 = vpop.permute.xlu0 %245
        %vm248 = vcmask 130048
        %v249 = vsel %vm248, %v220, %v238
        %vm250 = vcmask 261120
        %v251 = vsel %vm250, %v249, %v242
        %vm252 = vcmask 392192
        %v253 = vsel %vm252, %v251, %v246
        %v254 = vand.u32 2147483647, %v253
        %vm255 = vcmp.le.f32.partialorder %v254, 0.7853982
        %vm256 = vcmp.lt.s32.totalorder %v253, 0
        %v257 = vand.u32 %v253, 2139095040
        %v258 = vshrl.u32 %v257, 23
        %v259 = vsub.s32 %v258, 127
        %v260 = vand.u32 2147483647, %v253
        %v261 = vand.u32 %v260, 8388607
        %v262 = vor.u32 %v261, 8388608
        %v263 = vsub.s32 0, %v262
        %v264 = vadd.s32 %v259, 1
        %vm265 = vcmp.gt.s32.totalorder %v264, 0
        %v266 = vsel %vm265, %v264, 0
        %v267 = vshrl.u32 %v266, 5
        %v268 = vand.u32 %v266, 31
        %v269 = vsub.s32 32, %v268
        %v270 = vshrl.u32 683565275, %v269
        %v271 = vshll.u32 683565275, %v268
        %v272 = vshrl.u32 2475754826, %v269
        %v273 = vor.u32 %v271, %v272
        %v274 = vshll.u32 2475754826, %v268
        %v275 = vshrl.u32 2131351028, %v269
        %v276 = vor.u32 %v274, %v275
        %v277 = vshll.u32 2131351028, %v268
        %v278 = vshrl.u32 2102212464, %v269
        %v279 = vor.u32 %v277, %v278
        %v280 = vshll.u32 2102212464, %v268
        %v281 = vshrl.u32 920167782, %v269
        %v282 = vor.u32 %v280, %v281
        %v283 = vshll.u32 920167782, %v268
        %v284 = vshrl.u32 1326507024, %v269
        %v285 = vor.u32 %v283, %v284
        %vm286 = vcmp.lt.s32.totalorder %v267, 1
        %vm287 = vcmp.lt.s32.totalorder %v267, 2
        %vm288 = vcmp.lt.s32.totalorder %v267, 3
        %vm289 = vcmp.lt.s32.totalorder %v267, 4
        %v290 = vsel %vm286, %v270, %v273
        %v291 = vsel %vm289, %v279, 2102212464
        %v292 = vsel %vm288, %v276, %v291
        %v293 = vsel %vm287, %v290, %v292
        %v294 = vsel %vm286, %v273, %v276
        %v295 = vsel %vm289, %v282, 920167782
        %v296 = vsel %vm288, %v279, %v295
        %v297 = vsel %vm287, %v294, %v296
        %v298 = vsel %vm286, %v276, %v279
        %v299 = vsel %vm289, %v285, 1326507024
        %v300 = vsel %vm288, %v282, %v299
        %v301 = vsel %vm287, %v298, %v300
        %v302 = vshll.u32 %v262, 8
        %v303 = vmul.u32.u64.compose %v302, %v301
        %v304 = vextract.low.u32 %v303
        %v305 = vextract.high.u32 %v303
        %v306 = vmul.u32.u64.compose %v302, %v297
        %v307 = vextract.low.u32 %v306
        %v308 = vextract.high.u32 %v306
        %v309 = vmul.u32 %v302, %v293
        %v310 = vadd.s32 %v305, %v307
        %vm311 = vc.u32 %v305, %v307
        %v312 = vadd.s32 %v308, 1
        %v313 = vsel %vm311, %v312, %v308
        %v314 = vadd.s32 %v309, %v313
        %v315 = vadd.s32 %v314, 536870912
        %v316 = vshrl.u32 %v315, 30
        %v317 = vshll.u32 %v316, 30
        %v318 = vsub.s32 %v314, %v317
        %vm319 = vcmp.lt.s32.totalorder %v318, 0
        %v320 = vsub.s32 0, %v318
        %v321 = vsel %vm319, %v320, %v318
        %v322 = vclz %v321
        %v323 = vsub.s32 %v322, 2
        %vm324 = vcmp.gt.s32.totalorder 0, %v323
        %v325 = vsel %vm324, 0, %v323
        %v326 = vsub.s32 32, %v325
        %v327 = vshll.u32 %v318, %v325
        %v328 = vshrl.u32 %v310, %v326
        %v329 = vor.u32 %v327, %v328
        %v330 = vsub.s32 4294967266, %v325
        %v331 = vadd.s32 %v330, 127
        %v332 = vshll.u32 %v331, 23
        %v333 = vor.u32 4788187, %v332
        %v334 = vand.u32 2147483647, %v333
        %v336 = vcvt.s32.f32 %v329
        %v337 = vmul.f32 %v336, %v334
        %v338 = vxor.u32 %v337, 2147483648
        %v339 = vsel %vm256, %v338, %v337
        %v340 = vsub.s32 4, %v316
        %v341 = vsel %vm256, %v340, %v316
        %v342 = vsel %vm255, %v253, %v339
        %v343 = vsel %vm255, 0, %v341
        %v344 = vcosq.f32.pop %v342
        %v345 = vsinq.f32.pop %v342
        %vm346 = vweird.f32 %v253
        %v347 = vand.u32 %v343, 3
        %vm348 = vcmp.lt.s32.totalorder %v347, 2
        %vm349 = vcmp.eq.s32.totalorder %v347, 0
        %v350 = vxor.u32 %v345, 2147483648
        %v351 = vsel %vm349, %v344, %v350
        %vm352 = vcmp.eq.s32.totalorder %v347, 2
        %v353 = vxor.u32 %v344, 2147483648
        %v354 = vsel %vm352, %v353, %v345
        %v355 = vsel %vm348, %v351, %v354
        %v356 = vsel %vm346, nan, %v355
        %v357 = vsub.f32 %v356, 1.0
        %v358 = vmul.f32 %v357, 26.274143
        %v359 = vmul.f32 %v358, 1.442695
        %v360 = vpow.pop %v359
        %v361 = vld [vmem:[%s209] sm:$0xff]
        %363 = vset.pattern.permute.xlu0 0
        %364 = vperm.xlu0 %363, %v361
        %v365 = vpop.permute.xlu0 %364
        %367 = vset.pattern.permute.xlu0 1
        %368 = vperm.xlu0 %367, %v361
        %v369 = vpop.permute.xlu0 %368
        %371 = vset.pattern.permute.xlu0 2
        %372 = vperm.xlu0 %371, %v361
        %v373 = vpop.permute.xlu0 %372
        %375 = vset.pattern.permute.xlu0 3
        %376 = vperm.xlu0 %375, %v361
        %v377 = vpop.permute.xlu0 %376
        %v379 = vsel %vm248, %v365, %v369
        %v380 = vsel %vm250, %v379, %v373
        %v381 = vsel %vm252, %v380, %v377
        %v382 = vmul.f32 %v360, %v381
        %v383 = vld [vmem:[%s2] sm:$0xff]
        %v384 = vld [vmem:[%s2 + $0x8] sm:$0xff]
        %v385 = vld [vmem:[%s2 + $0x10] sm:$0xff]
        %v386 = vld [vmem:[%s2 + $0x18] sm:$0xff]
        %v387 = vld [vmem:[%s2 + $0x20] sm:$0xff]
        %v388 = vld [vmem:[%s2 + $0x28] sm:$0xff]
        %v389 = vld [vmem:[%s2 + $0x30] sm:$0xff]
        %v390 = vld [vmem:[%s2 + $0x38] sm:$0xff]
        %v391 = vld [vmem:[%s3] sm:$0x1]
        %v393 = vlaneseq
        %v394 = vshrl.u32 %v393, 7
        %v395 = vsub.s32 0, %v394
        %v396 = vrot.slane %v391, %v395
        %vm398 = vcmask 523264
        %v400 = vsel %vm398, %v382, 0
        %402 = vmatprep.subr.mxu0 0.0
        %403 = vmatpush1.msra.mxu0 %v383
        %404 = vmatprep.subr.mxu0 0.0
        %405 = vmatpush1.msra.mxu0 %v384
        %406 = vmatprep.subr.mxu0 0.0
        %407 = vmatpush1.msra.mxu0 %v385
        %408 = vmatprep.subr.mxu0 0.0
        %409 = vmatpush1.msra.mxu0 %v386
        %410 = vmatprep.subr.mxu0 0.0
        %411 = vmatpush1.msra.mxu0 %v387
        %412 = vmatprep.subr.mxu0 0.0
        %413 = vmatpush1.msra.mxu0 %v388
        %414 = vmatprep.subr.mxu0 0.0
        %415 = vmatpush1.msra.mxu0 %v389
        %416 = vmatprep.subr.mxu0 0.0
        %417 = vmatpush1.msra.mxu0 %v390
        %418 = vmatprep.subr.mxu0 0.0
        %419 = vmatpush1.msra.mxu0 0.0
        %420 = vmatprep.subr.mxu0 0.0
        %421 = vmatpush1.msra.mxu0 0.0
        %422 = vmatprep.subr.mxu0 0.0
        %423 = vmatpush1.msra.mxu0 0.0
        %424 = vmatprep.subr.mxu0 0.0
        %425 = vmatpush1.msra.mxu0 0.0
        %426 = vmatprep.subr.mxu0 0.0
        %427 = vmatpush1.msra.mxu0 0.0
        %428 = vmatprep.subr.mxu0 0.0
        %429 = vmatpush1.msra.mxu0 0.0
        %430 = vmatprep.subr.mxu0 0.0
        %431 = vmatpush1.msra.mxu0 0.0
        %432 = vmatprep.subr.mxu0 0.0
        %433 = vmatpush1.msra.mxu0 0.0
        %434 = vmatprep.subr.mxu0 0.0
        %435 = vmatpush1.msra.mxu0 0.0
        %436 = vmatprep.subr.mxu0 0.0
        %437 = vmatpush1.msra.mxu0 0.0
        %438 = vmatprep.subr.mxu0 0.0
        %439 = vmatpush1.msra.mxu0 0.0
        %440 = vmatprep.subr.mxu0 0.0
        %441 = vmatpush1.msra.mxu0 0.0
        %442 = vmatprep.subr.mxu0 0.0
        %443 = vmatpush1.msra.mxu0 0.0
        %444 = vmatprep.subr.mxu0 0.0
        %445 = vmatpush1.msra.mxu0 0.0
        %446 = vmatprep.subr.mxu0 0.0
        %447 = vmatpush1.msra.mxu0 0.0
        %448 = vmatprep.subr.mxu0 0.0
        %449 = vmatpush1.msra.mxu0 0.0
        %450 = vmatprep.subr.mxu0 0.0
        %451 = vmatpush1.msra.mxu0 0.0
        %452 = vmatprep.subr.mxu0 0.0
        %453 = vmatpush1.msra.mxu0 0.0
        %454 = vmatprep.subr.mxu0 0.0
        %455 = vmatpush1.msra.mxu0 0.0
        %456 = vmatprep.subr.mxu0 0.0
        %457 = vmatpush1.msra.mxu0 0.0
        %458 = vmatprep.subr.mxu0 0.0
        %459 = vmatpush1.msra.mxu0 0.0
        %460 = vmatprep.subr.mxu0 0.0
        %461 = vmatpush1.msra.mxu0 0.0
        %462 = vmatprep.subr.mxu0 0.0
        %463 = vmatpush1.msra.mxu0 0.0
        %464 = vmatprep.subr.mxu0 0.0
        %465 = vmatpush1.msra.mxu0 0.0
        %466 = vmatprep.mubr.f32.mxu0 0.0
        %467 = vmatmul.mubr.f32.gmra.mrb[0].mxu0 %v400
        %v468 = vpop.f32.mrb[0].mxu0
        %v469 = vadd.f32 %v396, %v468
        %v470 = vpop.f32.mrb[0].mxu0
        %471 = vdwg.mxu0
        %472 = vst.msk [vmem:[%s201] sm:$0xff] %vm250, %v469
        %s473 = sand.u32 %s120, 1
        %s474 = scalar_lea.sflag [#allocation3], %s473
        %s475 = sand.u32 %s120, 1
        %s476 = smul.addr %s475, 8
        %s477 = scalar_lea.vmem [#allocation2], %s476
        // Predicated region
        $region37: #{tpu_custom_call.1} parent=35 // pred_check
          %p478 = pneg %p130
        $region38: #{tpu_custom_call.1} parent=35 // pred_check_branch
          %480 = sbr.rel (%p478) target = $region40
        $region39: #{tpu_custom_call.1} parent=35 // pred_region
          %s482 = ssub.s32 128, 128
          %483 = vsyncadd %s474, %s482
          %s484 = smul.addr %s18, 128
          %s485 = scalar_lea.hbm %s4, %s484
          %s487 = sshll.u32 %s477, 4
          %s488 = int_to_ptr.vmem [resolvable:$true] %s487
          %490 = dma.vmem_to_hbm [thread:$0]  %s488, 128, %s485, %s474
        $region40: #{tpu_custom_call.1} parent=35 // pred_fallthru
          _
      $region36: #{tpu_custom_call.1} parent=5 // pred_fallthru
        _
      %p491 = scmp.le.s32.totalorder 2, %s13
      // Predicated region
      $region41: #{tpu_custom_call.1} parent=5 // pred_check
        %p492 = pneg %p491
      $region42: #{tpu_custom_call.1} parent=5 // pred_check_branch
        %494 = sbr.rel (%p492) target = $region44
      $region43: #{tpu_custom_call.1} parent=5 // pred_region
        %s495 = ssub.s32 %s13, 2
        // Predicated region
        $region45: #{tpu_custom_call.1} parent=43 // pred_check
          %p496 = pneg %p136
        $region46: #{tpu_custom_call.1} parent=43 // pred_check_branch
          %498 = sbr.rel (%p496) target = $region48
        $region47: #{tpu_custom_call.1} parent=43 // pred_region
          %s499 = sand.u32 %s121, 1
          %s500 = scalar_lea.sflag [#allocation3], %s499
          %s501 = sand.u32 %s121, 1
          %s502 = smul.addr %s501, 8
          %s503 = scalar_lea.vmem [#allocation2], %s502
          %504 = dma.done %s500, 128
        $region48: #{tpu_custom_call.1} parent=43 // pred_fallthru
          _
      $region44: #{tpu_custom_call.1} parent=5 // pred_fallthru
        _
    $region6: #{tpu_custom_call.1} parent=1 // loop_footer
      %s17 = sadd.s32 1, %s13
    $region7: #{tpu_custom_call.1} parent=1 // loop_footer_branch
      %12 = sbr.rel target = $region3
    $region8: #{tpu_custom_call.1} parent=1 // loop_exit
      _
    %505 = vsyncpa [#allocation3], 1
    %s506 = scalar_lea.sflag [#allocation3], 1
    %507 = vsyncpa %s506, 1

</llo_original>
